<compile_context>
chip_gen: v6e
topology: v6e:2x2x1
jax: 0.10.0
libtpu: 0.0.40
codegen_flags: <defaults>
</compile_context>

<pallas_src>
import jax
import jax.numpy as jnp
from jax.experimental import pallas as pl
from jax.experimental.pallas import tpu as pltpu


def _ptmodule_kernel(x_ref, o_ref):
    # Fused elementwise hot path: add, mul, square — all on the VPU.
    v = (x_ref[...] + 2.0) * 3.0
    o_ref[...] = v * v


def _round_up(n, m):
    return ((n + m - 1) // m) * m


def ptmodule_forward(x, *, target_block_bytes=2 * 1024 * 1024):
    """Apply ((x + 2) * 3) ** 2 elementwise via a Pallas TPU kernel.

    Works on any >=2-D array; leading dims are flattened into a row axis and
    the last dim stays as the lane-dense axis.
    """
    orig_shape = x.shape
    D = orig_shape[-1]
    R = 1
    for s in orig_shape[:-1]:
        R *= s
    x2 = x.reshape(R, D)

    itemsize = jnp.dtype(x.dtype).itemsize
    row_bytes = D * itemsize

    # Rows per block: ~target_block_bytes worth of data, multiple of 8
    # (sublane tiling), at least 8, and no larger than needed to cover R.
    rows_block = max(8, (target_block_bytes // max(row_bytes, 1)) // 8 * 8)
    rows_block = min(rows_block, _round_up(R, 8))

    grid = (pl.cdiv(R, rows_block),)
    block_bytes = rows_block * row_bytes

    # 2 input buffers + 2 output buffers (double buffering) + headroom,
    # clamped to stay well within every generation's scoped/physical VMEM.
    vmem_limit = min(max(4 * block_bytes + (4 << 20), 16 << 20), 48 << 20)

    out = pl.pallas_call(
        _ptmodule_kernel,
        out_shape=jax.ShapeDtypeStruct((R, D), x.dtype),
        grid_spec=pl.GridSpec(
            grid=grid,
            in_specs=[pl.BlockSpec((rows_block, D), lambda i: (i, 0))],
            out_specs=pl.BlockSpec((rows_block, D), lambda i: (i, 0)),
        ),
        compiler_params=pltpu.CompilerParams(
            dimension_semantics=("parallel",),
            vmem_limit_bytes=vmem_limit,
        ),
    )(x2)
    return out.reshape(orig_shape)


if __name__ == "__main__":
    key = jax.random.PRNGKey(0)
    # Small 3-D input consistent with the forward's [i, j, k] indexing.
    B, S, D = 2, 8, 128
    x = jax.random.normal(key, (B, S, D), dtype=jnp.float32)

    out = ptmodule_forward(x)
    out = jax.block_until_ready(out)

    # Reference check (pure JAX) to make sure semantics match.
    ref = ((x + 2.0) * 3.0) ** 2
    assert out.shape == ref.shape and out.dtype == ref.dtype
    assert jnp.allclose(out, ref, rtol=1e-6, atol=1e-6)

    print("KERNEL_OK")
</pallas_src>

<mosaic_0001>
module attributes {stable_mosaic.version = 11 : i64} {
  func.func @_ptmodule_kernel(%arg0: i32, %arg1: memref<16x128xf32, #tpu.memory_space<vmem>>, %arg2: memref<16x128xf32, #tpu.memory_space<vmem>>) attributes {dimension_semantics = [#tpu.dimension_semantics<parallel>], iteration_bounds = array<i64: 1>, scalar_prefetch = 0 : i64, scratch_operands = 0 : i64, tpu.core_type = #tpu.core_type<tc>, window_params = [{transform_indices = @transform_0, window_bounds = array<i64: 16, 128>}, {transform_indices = @transform_1, window_bounds = array<i64: 16, 128>}]} {
    %c0 = arith.constant 0 : index
    %c0_0 = arith.constant 0 : index
    %0 = vector.load %arg1[%c0, %c0_0] : memref<16x128xf32, #tpu.memory_space<vmem>>, vector<16x128xf32>
    %cst = arith.constant 2.000000e+00 : f32
    %1 = vector.broadcast %cst : f32 to vector<16x128xf32>
    %2 = arith.addf %0, %1 : vector<16x128xf32>
    %cst_1 = arith.constant 3.000000e+00 : f32
    %3 = vector.broadcast %cst_1 : f32 to vector<16x128xf32>
    %4 = arith.mulf %2, %3 : vector<16x128xf32>
    %5 = arith.mulf %4, %4 : vector<16x128xf32>
    %c0_2 = arith.constant 0 : index
    %c0_3 = arith.constant 0 : index
    %6 = vector.load %arg2[%c0_2, %c0_3] : memref<16x128xf32, #tpu.memory_space<vmem>>, vector<16x128xf32>
    tpu.vector_store %arg2[%c0_2, %c0_3], %5 {strides = array<i32>} : memref<16x128xf32, #tpu.memory_space<vmem>>, vector<16x128xf32>,
    return
  }
  func.func @transform_0(%arg0: i32) -> (i32, i32) {
    %c0_i32 = arith.constant 0 : i32
    %c0_i32_0 = arith.constant 0 : i32
    return %arg0, %c0_i32 : i32, i32
  }
  func.func @transform_1(%arg0: i32) -> (i32, i32) {
    %c0_i32 = arith.constant 0 : i32
    %c0_i32_0 = arith.constant 0 : i32
    return %arg0, %c0_i32 : i32, i32
  }
}

</mosaic_0001>

<llo_original>
// kernel: tpu_custom_call.1
$region0: #{tpu_custom_call.1}
  #allocation0 [shape = 'u32[]', space=smem, size = 0x4, offset = 0x4, fixed_abs, tag = 'smem constant byte address 0x4 - core index']
  #allocation1 [shape = 'u32[144,128]{1,0:T(1,128)}', space=vmem, size = 0x12000, scoped, tag = 'internal scratch']
  %s0 = inlined_call_operand.hbm [shape: f32[16,128], index: 0, kind: input, shape index: {}]
  %s1 = inlined_call_operand.hbm [shape: f32[16,128], index: 1, kind: output, shape index: {}]
  %s2 = sld [smem:[#allocation0]]
  $region18: #{tpu_custom_call.1} parent=0
    _
  %s4 = ssub.s32 1, %s2
  %s5 = scalar_select 0, %s4, %s2
  $region1: #{tpu_custom_call.1} parent=0
    #allocation2 [shape = 'u8[8192]{0}', space=vmem, size = 0x2000, scoped, tag = 'input window, operand 0, single buffered']
    #allocation3 [shape = 's32[1]{0}', space=sflag, size = 0x4, scoped, tag = 'scoped memory for tpu_custom_call.1']
    #allocation4 [shape = 's32[1]{0}', space=sflag, size = 0x4, scoped, tag = 'scoped memory for tpu_custom_call.1']
    #allocation5 [shape = 'u8[8192]{0}', space=vmem, size = 0x2000, scoped, tag = 'output window, operand 0, single buffered']
    %6 = vsyncpa [#allocation3], 0
    %7 = vsyncpa [#allocation4], 0
    // Predicated region
    $region2: #{tpu_custom_call.1} parent=1 // pred_check
      _
    $region3: #{tpu_custom_call.1} parent=1 // pred_check_branch
      %9 = sbr.rel (0) target = $region5
    $region4: #{tpu_custom_call.1} parent=1 // pred_region
      %s11 = ssub.s32 256, 256
      %12 = vsyncadd [#allocation3], %s11
      %s13 = sshll.u32 [#allocation2], 4
      %s14 = int_to_ptr.vmem [resolvable:$true] %s13
      %19 = dma.hbm_to_vmem [thread:$0]  %s0, 256, %s14, [#allocation3], 128, 128, 8
    $region5: #{tpu_custom_call.1} parent=1 // pred_fallthru
      _
    // Predicated region
    $region6: #{tpu_custom_call.1} parent=1 // pred_check
      _
    $region7: #{tpu_custom_call.1} parent=1 // pred_check_branch
      %21 = sbr.rel (0) target = $region9
    $region8: #{tpu_custom_call.1} parent=1 // pred_region
      %22 = dma.done [#allocation3], 256
    $region9: #{tpu_custom_call.1} parent=1 // pred_fallthru
      _
    %v23 = vld [vmem:[#allocation2] sm:$0xff]
    %v24 = vld [vmem:[#allocation2 + $0x8] sm:$0xff]
    %v25 = vadd.f32 %v23, 2.0
    %v26 = vadd.f32 %v24, 2.0
    %v27 = vmul.f32 %v25, 3.0
    %v28 = vmul.f32 %v26, 3.0
    %v29 = vmul.f32 %v27, %v27
    %v30 = vmul.f32 %v28, %v28
    %31 = vst [vmem:[#allocation5] sm:$0xff] %v29
    %32 = vst [vmem:[#allocation5 + $0x8] sm:$0xff] %v30
    // Predicated region
    $region10: #{tpu_custom_call.1} parent=1 // pred_check
      _
    $region11: #{tpu_custom_call.1} parent=1 // pred_check_branch
      %34 = sbr.rel (0) target = $region13
    $region12: #{tpu_custom_call.1} parent=1 // pred_region
      %s36 = ssub.s32 256, 256
      %37 = vsyncadd [#allocation4], %s36
      %s38 = sshll.u32 [#allocation5], 4
      %s39 = int_to_ptr.vmem [resolvable:$true] %s38
      %44 = dma.vmem_to_hbm [thread:$0]  %s39, 256, %s1, [#allocation4], 128, 128, 8
    $region13: #{tpu_custom_call.1} parent=1 // pred_fallthru
      _
    // Predicated region
    $region14: #{tpu_custom_call.1} parent=1 // pred_check
      _
    $region15: #{tpu_custom_call.1} parent=1 // pred_check_branch
      %46 = sbr.rel (0) target = $region17
    $region16: #{tpu_custom_call.1} parent=1 // pred_region
      %47 = dma.done [#allocation4], 256
    $region17: #{tpu_custom_call.1} parent=1 // pred_fallthru
      _
    %48 = vsyncpa [#allocation3], 1
    %49 = vsyncpa [#allocation4], 1

</llo_original>
